<compile_context>
chip_gen: v7x
topology: tpu7x:2x2x1
jax: 0.10.0
libtpu: 0.0.40
codegen_flags: <defaults>
</compile_context>

<pallas_src>
import jax
import jax.numpy as jnp
from jax.experimental import pallas as pl
from jax.experimental.pallas import tpu as pltpu  # noqa: F401  (TPU backend)

LANE = 128           # lane-pad all out-feature dims (16 -> 128, 7 -> 128)
IN_FEATS = 1433
IN_FEATS_PAD = 1536  # 12 * 128 -> lane-dense K for the layer-1 contraction


def fused_gcn_kernel(adj_ref, x_ref, w1_ref, b1_ref, w2_ref, b2_ref, o_ref):
    # adj: (N, N)   bf16 (exact 0/1)     x : (N, Kp)  bf16
    # w1 : (Kp,128) bf16 (K-major)       b1: (1, 128) f32
    # w2 : (128,128) bf16 (K-major)      b2: (1, 128) f32
    # o  : (N, 128) f32
    adj = adj_ref[...]

    # ---- layer 1: project (contract padded in-feats), then aggregate
    p1 = jnp.dot(x_ref[...], w1_ref[...],
                 preferred_element_type=jnp.float32)                  # (N, 128)
    h1 = jnp.maximum(
        jnp.dot(adj, p1.astype(jnp.bfloat16),
                preferred_element_type=jnp.float32) + b1_ref[...],
        0.0)                                                          # (N, 128)

    # ---- layer 2 (padded hidden columns of h1 are exactly zero)
    p2 = jnp.dot(h1.astype(jnp.bfloat16), w2_ref[...],
                 preferred_element_type=jnp.float32)                  # (N, 128)
    h2 = jnp.maximum(
        jnp.dot(adj, p2.astype(jnp.bfloat16),
                preferred_element_type=jnp.float32) + b2_ref[...],
        0.0)                                                          # (N, 128)

    o_ref[...] = h2.astype(o_ref.dtype)


def prepare_params(params):
    """One-time parameter prep (hoisted out of the per-call hot path):
       K-major (in, out) layout, lane-padded out-dims, K padded to 1536,
       bf16 storage (f32 biases, f32 MXU accumulation happens in-kernel)."""
    w1, b1, w2, b2 = params
    hidden, in_feats = w1.shape          # (16, 1433)
    out_feats = w2.shape[0]              # 7
    w1p = (jnp.zeros((IN_FEATS_PAD, LANE), jnp.float32)
           .at[:in_feats, :hidden].set(w1.T)).astype(jnp.bfloat16)
    b1p = jnp.zeros((1, LANE), jnp.float32).at[0, :hidden].set(b1)
    w2p = (jnp.zeros((LANE, LANE), jnp.float32)
           .at[:hidden, :out_feats].set(w2.T)).astype(jnp.bfloat16)
    b2p = jnp.zeros((1, LANE), jnp.float32).at[0, :out_feats].set(b2)
    return w1p, b1p, w2p, b2p, out_feats


def prepare_graph(adj, features):
    """One-time graph/feature prep: bf16 cast (adj is exact 0/1 -> lossless)
    and zero-pad features' in_feats to 1536 so the X DMA is lane-dense."""
    n, in_feats = features.shape
    x_p = (jnp.zeros((n, IN_FEATS_PAD), jnp.float32)
           .at[:, :in_feats].set(features)).astype(jnp.bfloat16)
    return adj.astype(jnp.bfloat16), x_p


def net_forward(adj_p, x_p, prepped_params):
    """2-layer GCN Net: 1433 -> 16 -> 7, ReLU (matches the PyTorch Net)."""
    w1p, b1p, w2p, b2p, out_feats = prepped_params
    n = adj_p.shape[0]
    out_padded = pl.pallas_call(
        fused_gcn_kernel,
        out_shape=jax.ShapeDtypeStruct((n, LANE), jnp.float32),
        in_specs=[
            pl.BlockSpec((n, n), lambda: (0, 0)),
            pl.BlockSpec((n, IN_FEATS_PAD), lambda: (0, 0)),
            pl.BlockSpec((IN_FEATS_PAD, LANE), lambda: (0, 0)),
            pl.BlockSpec((1, LANE), lambda: (0, 0)),
            pl.BlockSpec((LANE, LANE), lambda: (0, 0)),
            pl.BlockSpec((1, LANE), lambda: (0, 0)),
        ],
        out_specs=pl.BlockSpec((n, LANE), lambda: (0, 0)),
    )(adj_p, x_p, w1p, b1p, w2p, b2p)
    return out_padded[:, :out_feats]


def init_params(key, in_feats=IN_FEATS, hidden=16, out_feats=7):
    k1, k2, k3, k4 = jax.random.split(key, 4)
    # nn.Linear shapes: weight (out, in), bias (out,)
    w1 = jax.random.normal(k1, (hidden, in_feats), jnp.float32) * 0.05
    b1 = jax.random.normal(k2, (hidden,), jnp.float32) * 0.01
    w2 = jax.random.normal(k3, (out_feats, hidden), jnp.float32) * 0.05
    b2 = jax.random.normal(k4, (out_feats,), jnp.float32) * 0.01
    return w1, b1, w2, b2


if __name__ == "__main__":
    key = jax.random.PRNGKey(0)
    k_feat, k_adj, k_param = jax.random.split(key, 3)

    N = 32                 # small synthetic graph
    features = jax.random.normal(k_feat, (N, IN_FEATS), jnp.float32)
    # deterministic random directed graph; adj[dst, src] = 1 if edge src->dst
    adj = (jax.random.uniform(k_adj, (N, N)) < 0.2).astype(jnp.float32)

    params = init_params(k_param)
    prepped = prepare_params(params)        # one-time, outside the hot path
    adj_p, x_p = prepare_graph(adj, features)

    out = jax.block_until_ready(net_forward(adj_p, x_p, prepped))
    assert out.shape == (N, 7), out.shape

    # Reference 1: exact mirror of the kernel's bf16 math (f32 accumulation).
    def ref_bf16(adj_b, x_b, prepped_p):
        w1p, b1p, w2p, b2p, out_feats = prepped_p
        f32 = lambda t: t.astype(jnp.float32)
        p1 = f32(x_b) @ f32(w1p)
        h1 = jnp.maximum(f32(adj_b) @ f32(p1.astype(jnp.bfloat16)) + b1p, 0.0)
        p2 = f32(h1.astype(jnp.bfloat16)) @ f32(w2p)
        h2 = jnp.maximum(f32(adj_b) @ f32(p2.astype(jnp.bfloat16)) + b2p, 0.0)
        return h2[:, :out_feats]

    # Reference 2: original full-f32 module math (semantic sanity check).
    def ref_f32(adj_f, x_f, p):
        w1, b1, w2, b2 = p
        h = jnp.maximum(adj_f @ x_f @ w1.T + b1, 0.0)
        return jnp.maximum(adj_f @ h @ w2.T + b2, 0.0)

    assert jnp.allclose(out, ref_bf16(adj_p, x_p, prepped), atol=2e-3, rtol=2e-3)
    assert jnp.allclose(out, ref_f32(adj, features, params), atol=1e-1, rtol=1e-1)

    print("KERNEL_OK")
</pallas_src>

<mosaic_0001>
module attributes {stable_mosaic.version = 11 : i64} {
  func.func @fused_gcn_kernel(%arg0: memref<32x32xbf16, #tpu.memory_space<vmem>>, %arg1: memref<32x1536xbf16, #tpu.memory_space<vmem>>, %arg2: memref<1536x128xbf16, #tpu.memory_space<vmem>>, %arg3: memref<1x128xf32, #tpu.memory_space<vmem>>, %arg4: memref<128x128xbf16, #tpu.memory_space<vmem>>, %arg5: memref<1x128xf32, #tpu.memory_space<vmem>>, %arg6: memref<32x128xf32, #tpu.memory_space<vmem>>) attributes {dimension_semantics = [], scalar_prefetch = 0 : i64, scratch_operands = 0 : i64, tpu.core_type = #tpu.core_type<tc>} {
    %c0 = arith.constant 0 : index
    %c0_0 = arith.constant 0 : index
    %0 = vector.load %arg0[%c0, %c0_0] : memref<32x32xbf16, #tpu.memory_space<vmem>>, vector<32x32xbf16>
    %c0_1 = arith.constant 0 : index
    %c0_2 = arith.constant 0 : index
    %1 = vector.load %arg1[%c0_1, %c0_2] : memref<32x1536xbf16, #tpu.memory_space<vmem>>, vector<32x1536xbf16>
    %c0_3 = arith.constant 0 : index
    %c0_4 = arith.constant 0 : index
    %2 = vector.load %arg2[%c0_3, %c0_4] : memref<1536x128xbf16, #tpu.memory_space<vmem>>, vector<1536x128xbf16>
    %cst = arith.constant dense<0.000000e+00> : vector<32x128xf32>
    %3 = tpu.matmul %1, %2, %cst {dimension_numbers = #tpu.dot_dimension_numbers<[1], [0], [0], [1], [0, 0, 1, 1], [], []>} : vector<32x1536xbf16>, vector<1536x128xbf16>, vector<32x128xf32> -> vector<32x128xf32>
    %4 = arith.truncf %3 : vector<32x128xf32> to vector<32x128xbf16>
    %cst_5 = arith.constant dense<0.000000e+00> : vector<32x128xf32>
    %5 = tpu.matmul %0, %4, %cst_5 {dimension_numbers = #tpu.dot_dimension_numbers<[1], [0], [0], [1], [0, 0, 1, 1], [], []>} : vector<32x32xbf16>, vector<32x128xbf16>, vector<32x128xf32> -> vector<32x128xf32>
    %c0_6 = arith.constant 0 : index
    %c0_7 = arith.constant 0 : index
    %6 = vector.load %arg3[%c0_6, %c0_7] : memref<1x128xf32, #tpu.memory_space<vmem>>, vector<1x128xf32>
    %7 = vector.broadcast %6 : vector<1x128xf32> to vector<32x128xf32>
    %8 = arith.addf %5, %7 : vector<32x128xf32>
    %cst_8 = arith.constant 0.000000e+00 : f32
    %9 = vector.broadcast %cst_8 : f32 to vector<32x128xf32>
    %10 = arith.maximumf %8, %9 : vector<32x128xf32>
    %11 = arith.truncf %10 : vector<32x128xf32> to vector<32x128xbf16>
    %c0_9 = arith.constant 0 : index
    %c0_10 = arith.constant 0 : index
    %12 = vector.load %arg4[%c0_9, %c0_10] : memref<128x128xbf16, #tpu.memory_space<vmem>>, vector<128x128xbf16>
    %cst_11 = arith.constant dense<0.000000e+00> : vector<32x128xf32>
    %13 = tpu.matmul %11, %12, %cst_11 {dimension_numbers = #tpu.dot_dimension_numbers<[1], [0], [0], [1], [0, 0, 1, 1], [], []>} : vector<32x128xbf16>, vector<128x128xbf16>, vector<32x128xf32> -> vector<32x128xf32>
    %14 = arith.truncf %13 : vector<32x128xf32> to vector<32x128xbf16>
    %cst_12 = arith.constant dense<0.000000e+00> : vector<32x128xf32>
    %15 = tpu.matmul %0, %14, %cst_12 {dimension_numbers = #tpu.dot_dimension_numbers<[1], [0], [0], [1], [0, 0, 1, 1], [], []>} : vector<32x32xbf16>, vector<32x128xbf16>, vector<32x128xf32> -> vector<32x128xf32>
    %c0_13 = arith.constant 0 : index
    %c0_14 = arith.constant 0 : index
    %16 = vector.load %arg5[%c0_13, %c0_14] : memref<1x128xf32, #tpu.memory_space<vmem>>, vector<1x128xf32>
    %17 = vector.broadcast %16 : vector<1x128xf32> to vector<32x128xf32>
    %18 = arith.addf %15, %17 : vector<32x128xf32>
    %cst_15 = arith.constant 0.000000e+00 : f32
    %19 = vector.broadcast %cst_15 : f32 to vector<32x128xf32>
    %20 = arith.maximumf %18, %19 : vector<32x128xf32>
    %c0_16 = arith.constant 0 : index
    %c0_17 = arith.constant 0 : index
    %21 = vector.load %arg6[%c0_16, %c0_17] : memref<32x128xf32, #tpu.memory_space<vmem>>, vector<32x128xf32>
    tpu.vector_store %arg6[%c0_16, %c0_17], %20 {strides = array<i32>} : memref<32x128xf32, #tpu.memory_space<vmem>>, vector<32x128xf32>,
    return
  }
}

</mosaic_0001>

<llo_original>
// kernel: tpu_custom_call.1
$region0: #{tpu_custom_call.1}
  #allocation0 [shape = 'u32[]', space=smem, size = 0x4, offset = 0x4, fixed_abs, tag = 'smem constant byte address 0x4 - core index']
  #allocation1 [shape = 'u32[144,128]{1,0:T(1,128)}', space=vmem, size = 0x12000, scoped, tag = 'internal scratch']
  %s0 = inlined_call_operand.hbm [shape: bf16[32,32], index: 0, kind: input, shape index: {}]
  %s1 = inlined_call_operand.hbm [shape: bf16[32,1536], index: 1, kind: input, shape index: {}]
  %s2 = inlined_call_operand.hbm [shape: bf16[1536,128], index: 2, kind: input, shape index: {}]
  %s3 = inlined_call_operand.vmem [shape: f32[1,128], index: 3, kind: input, shape index: {}]
  %s4 = inlined_call_operand.hbm [shape: bf16[128,128], index: 4, kind: input, shape index: {}]
  %s5 = inlined_call_operand.vmem [shape: f32[1,128], index: 5, kind: input, shape index: {}]
  %s6 = inlined_call_operand.hbm [shape: f32[32,128], index: 6, kind: output, shape index: {}]
  %s7 = sld [smem:[#allocation0]]
  $region50: #{tpu_custom_call.1} parent=0
    _
  %s9 = ssub.s32 1, %s7
  %s10 = scalar_select 0, %s9, %s7
  $region1: #{tpu_custom_call.1} parent=0
    #allocation2 [shape = 'u8[8192]{0}', space=vmem, size = 0x2000, scoped, tag = 'input window, operand 0, single buffered']
    #allocation3 [shape = 's32[1]{0}', space=sflag, size = 0x4, scoped, tag = 'scoped memory for tpu_custom_call.1']
    #allocation4 [shape = 's32[1]{0}', space=sflag, size = 0x4, scoped, tag = 'scoped memory for tpu_custom_call.1']
    #allocation5 [shape = 'u8[98304]{0}', space=vmem, size = 0x18000, scoped, tag = 'input window, operand 1, single buffered']
    #allocation6 [shape = 's32[1]{0}', space=sflag, size = 0x4, scoped, tag = 'scoped memory for tpu_custom_call.1']
    #allocation7 [shape = 'u8[393216]{0}', space=vmem, size = 0x60000, scoped, tag = 'input window, operand 2, single buffered']
    #allocation8 [shape = 'u8[32768]{0}', space=vmem, size = 0x8000, scoped, tag = 'input window, operand 4, single buffered']
    #allocation9 [shape = 's32[1]{0}', space=sflag, size = 0x4, scoped, tag = 'scoped memory for tpu_custom_call.1']
    #allocation10 [shape = 'u8[16384]{0}', space=vmem, size = 0x4000, scoped, tag = 'output window, operand 0, single buffered']
    %11 = vsyncpa [#allocation3], 0
    %12 = vsyncpa [#allocation6], 0
    %13 = vsyncpa [#allocation9], 0
    %14 = vsyncpa [#allocation4], 0
    // Predicated region
    $region2: #{tpu_custom_call.1} parent=1 // pred_check
      _
    $region3: #{tpu_custom_call.1} parent=1 // pred_check_branch
      %16 = sbr.rel (0) target = $region5
    $region4: #{tpu_custom_call.1} parent=1 // pred_region
      %s18 = ssub.s32 256, 256
      %19 = vsyncadd [#allocation3], %s18
      %s20 = sshll.u32 [#allocation2], 4
      %s21 = int_to_ptr.vmem [resolvable:$true] %s20
      %26 = dma.hbm_to_vmem [thread:$0]  %s0, 256, %s21, [#allocation3], 64, 64, 4
    $region5: #{tpu_custom_call.1} parent=1 // pred_fallthru
      _
    // Predicated region
    $region6: #{tpu_custom_call.1} parent=1 // pred_check
      _
    $region7: #{tpu_custom_call.1} parent=1 // pred_check_branch
      %28 = sbr.rel (0) target = $region9
    $region8: #{tpu_custom_call.1} parent=1 // pred_region
      %s30 = ssub.s32 3072, 3072
      %31 = vsyncadd [#allocation6], %s30
      %s32 = sshll.u32 [#allocation5], 4
      %s33 = int_to_ptr.vmem [resolvable:$true] %s32
      %38 = dma.hbm_to_vmem [thread:$0]  %s1, 3072, %s33, [#allocation6], 768, 768, 48
    $region9: #{tpu_custom_call.1} parent=1 // pred_fallthru
      _
    // Predicated region
    $region10: #{tpu_custom_call.1} parent=1 // pred_check
      _
    $region11: #{tpu_custom_call.1} parent=1 // pred_check_branch
      %40 = sbr.rel (0) target = $region13
    $region12: #{tpu_custom_call.1} parent=1 // pred_region
      %s42 = ssub.s32 12288, 12288
      %43 = vsyncadd [#allocation6], %s42
      %s44 = sshll.u32 [#allocation7], 4
      %s45 = int_to_ptr.vmem [resolvable:$true] %s44
      %50 = dma.hbm_to_vmem [thread:$0]  %s2, 12288, %s45, [#allocation6], 64, 64, 4
    $region13: #{tpu_custom_call.1} parent=1 // pred_fallthru
      _
    // Predicated region
    $region14: #{tpu_custom_call.1} parent=1 // pred_check
      _
    $region15: #{tpu_custom_call.1} parent=1 // pred_check_branch
      %52 = sbr.rel (0) target = $region17
    $region16: #{tpu_custom_call.1} parent=1 // pred_region
      _
    $region17: #{tpu_custom_call.1} parent=1 // pred_fallthru
      _
    // Predicated region
    $region18: #{tpu_custom_call.1} parent=1 // pred_check
      _
    $region19: #{tpu_custom_call.1} parent=1 // pred_check_branch
      %54 = sbr.rel (0) target = $region21
    $region20: #{tpu_custom_call.1} parent=1 // pred_region
      %s56 = ssub.s32 1024, 1024
      %57 = vsyncadd [#allocation9], %s56
      %s58 = sshll.u32 [#allocation8], 4
      %s59 = int_to_ptr.vmem [resolvable:$true] %s58
      %64 = dma.hbm_to_vmem [thread:$0]  %s4, 1024, %s59, [#allocation9], 64, 64, 4
    $region21: #{tpu_custom_call.1} parent=1 // pred_fallthru
      _
    // Predicated region
    $region22: #{tpu_custom_call.1} parent=1 // pred_check
      _
    $region23: #{tpu_custom_call.1} parent=1 // pred_check_branch
      %66 = sbr.rel (0) target = $region25
    $region24: #{tpu_custom_call.1} parent=1 // pred_region
      _
    $region25: #{tpu_custom_call.1} parent=1 // pred_fallthru
      _
    // Predicated region
    $region26: #{tpu_custom_call.1} parent=1 // pred_check
      _
    $region27: #{tpu_custom_call.1} parent=1 // pred_check_branch
      %68 = sbr.rel (0) target = $region29
    $region28: #{tpu_custom_call.1} parent=1 // pred_region
      %69 = dma.done [#allocation3], 256
    $region29: #{tpu_custom_call.1} parent=1 // pred_fallthru
      _
    // Predicated region
    $region30: #{tpu_custom_call.1} parent=1 // pred_check
      _
    $region31: #{tpu_custom_call.1} parent=1 // pred_check_branch
      %71 = sbr.rel (0) target = $region33
    $region32: #{tpu_custom_call.1} parent=1 // pred_region
      %72 = dma.done [#allocation6], 3072
    $region33: #{tpu_custom_call.1} parent=1 // pred_fallthru
      _
    // Predicated region
    $region34: #{tpu_custom_call.1} parent=1 // pred_check
      _
    $region35: #{tpu_custom_call.1} parent=1 // pred_check_branch
      %74 = sbr.rel (0) target = $region37
    $region36: #{tpu_custom_call.1} parent=1 // pred_region
      %75 = dma.done [#allocation6], 12288
    $region37: #{tpu_custom_call.1} parent=1 // pred_fallthru
      _
    // Predicated region
    $region38: #{tpu_custom_call.1} parent=1 // pred_check
      _
    $region39: #{tpu_custom_call.1} parent=1 // pred_check_branch
      %77 = sbr.rel (0) target = $region41
    $region40: #{tpu_custom_call.1} parent=1 // pred_region
      %78 = dma.done [#allocation9], 1024
    $region41: #{tpu_custom_call.1} parent=1 // pred_fallthru
      _
    %v80 = vld [vmem:[#allocation2] sm:$0xf]
    %v81 = vld [vmem:[#allocation2 + $0x4] sm:$0xf]
    %v82 = vld [vmem:[#allocation2 + $0x8] sm:$0xf]
    %v83 = vld [vmem:[#allocation2 + $0xc] sm:$0xf]
    %v84 = vld [vmem:[#allocation5] sm:$0xff]
    %v85 = vld [vmem:[#allocation5 + $0x8] sm:$0xff]
    %v86 = vld [vmem:[#allocation5 + $0x10] sm:$0xff]
    %v87 = vld [vmem:[#allocation5 + $0x18] sm:$0xff]
    %v88 = vld [vmem:[#allocation5 + $0x20] sm:$0xff]
    %v89 = vld [vmem:[#allocation5 + $0x28] sm:$0xff]
    %v90 = vld [vmem:[#allocation5 + $0x30] sm:$0xff]
    %v91 = vld [vmem:[#allocation5 + $0x38] sm:$0xff]
    %v92 = vld [vmem:[#allocation5 + $0x40] sm:$0xff]
    %v93 = vld [vmem:[#allocation5 + $0x48] sm:$0xff]
    %v94 = vld [vmem:[#allocation5 + $0x50] sm:$0xff]
    %v95 = vld [vmem:[#allocation5 + $0x58] sm:$0xff]
    %v96 = vld [vmem:[#allocation5 + $0x60] sm:$0xff]
    %v97 = vld [vmem:[#allocation5 + $0x68] sm:$0xff]
    %v98 = vld [vmem:[#allocation5 + $0x70] sm:$0xff]
    %v99 = vld [vmem:[#allocation5 + $0x78] sm:$0xff]
    %v100 = vld [vmem:[#allocation5 + $0x80] sm:$0xff]
    %v101 = vld [vmem:[#allocation5 + $0x88] sm:$0xff]
    %v102 = vld [vmem:[#allocation5 + $0x90] sm:$0xff]
    %v103 = vld [vmem:[#allocation5 + $0x98] sm:$0xff]
    %v104 = vld [vmem:[#allocation5 + $0xa0] sm:$0xff]
    %v105 = vld [vmem:[#allocation5 + $0xa8] sm:$0xff]
    %v106 = vld [vmem:[#allocation5 + $0xb0] sm:$0xff]
    %v107 = vld [vmem:[#allocation5 + $0xb8] sm:$0xff]
    %v108 = vld [vmem:[#allocation7] sm:$0xf]
    %v109 = vld [vmem:[#allocation7 + $0x4] sm:$0xf]
    %v110 = vld [vmem:[#allocation7 + $0x8] sm:$0xf]
    %v111 = vld [vmem:[#allocation7 + $0xc] sm:$0xf]
    %v112 = vld [vmem:[#allocation7 + $0x10] sm:$0xf]
    %v113 = vld [vmem:[#allocation7 + $0x14] sm:$0xf]
    %v114 = vld [vmem:[#allocation7 + $0x18] sm:$0xf]
    %v115 = vld [vmem:[#allocation7 + $0x1c] sm:$0xf]
    %v116 = vld [vmem:[#allocation7 + $0x20] sm:$0xf]
    %v117 = vld [vmem:[#allocation7 + $0x24] sm:$0xf]
    %v118 = vld [vmem:[#allocation7 + $0x28] sm:$0xf]
    %v119 = vld [vmem:[#allocation7 + $0x2c] sm:$0xf]
    %v120 = vld [vmem:[#allocation7 + $0x30] sm:$0xf]
    %v121 = vld [vmem:[#allocation7 + $0x34] sm:$0xf]
    %v122 = vld [vmem:[#allocation7 + $0x38] sm:$0xf]
    %v123 = vld [vmem:[#allocation7 + $0x3c] sm:$0xf]
    %v124 = vld [vmem:[#allocation7 + $0x40] sm:$0xf]
    %v125 = vld [vmem:[#allocation7 + $0x44] sm:$0xf]
    %v126 = vld [vmem:[#allocation7 + $0x48] sm:$0xf]
    %v127 = vld [vmem:[#allocation7 + $0x4c] sm:$0xf]
    %v128 = vld [vmem:[#allocation7 + $0x50] sm:$0xf]
    %v129 = vld [vmem:[#allocation7 + $0x54] sm:$0xf]
    %v130 = vld [vmem:[#allocation7 + $0x58] sm:$0xf]
    %v131 = vld [vmem:[#allocation7 + $0x5c] sm:$0xf]
    %v132 = vld [vmem:[#allocation7 + $0x60] sm:$0xf]
    %v133 = vld [vmem:[#allocation7 + $0x64] sm:$0xf]
    %v134 = vld [vmem:[#allocation7 + $0x68] sm:$0xf]
    %v135 = vld [vmem:[#allocation7 + $0x6c] sm:$0xf]
    %v136 = vld [vmem:[#allocation7 + $0x70] sm:$0xf]
    %v137 = vld [vmem:[#allocation7 + $0x74] sm:$0xf]
    %v138 = vld [vmem:[#allocation7 + $0x78] sm:$0xf]
    %v139 = vld [vmem:[#allocation7 + $0x7c] sm:$0xf]
    %v140 = vld [vmem:[#allocation7 + $0x80] sm:$0xf]
    %v141 = vld [vmem:[#allocation7 + $0x84] sm:$0xf]
    %v142 = vld [vmem:[#allocation7 + $0x88] sm:$0xf]
    %v143 = vld [vmem:[#allocation7 + $0x8c] sm:$0xf]
    %v144 = vld [vmem:[#allocation7 + $0x90] sm:$0xf]
    %v145 = vld [vmem:[#allocation7 + $0x94] sm:$0xf]
    %v146 = vld [vmem:[#allocation7 + $0x98] sm:$0xf]
    %v147 = vld [vmem:[#allocation7 + $0x9c] sm:$0xf]
    %v148 = vld [vmem:[#allocation7 + $0xa0] sm:$0xf]
    %v149 = vld [vmem:[#allocation7 + $0xa4] sm:$0xf]
    %v150 = vld [vmem:[#allocation7 + $0xa8] sm:$0xf]
    %v151 = vld [vmem:[#allocation7 + $0xac] sm:$0xf]
    %v152 = vld [vmem:[#allocation7 + $0xb0] sm:$0xf]
    %v153 = vld [vmem:[#allocation7 + $0xb4] sm:$0xf]
    %v154 = vld [vmem:[#allocation7 + $0xb8] sm:$0xf]
    %v155 = vld [vmem:[#allocation7 + $0xbc] sm:$0xf]
    %v156 = vld [vmem:[#allocation7 + $0xc0] sm:$0xf]
    %v157 = vld [vmem:[#allocation7 + $0xc4] sm:$0xf]
    %v158 = vld [vmem:[#allocation7 + $0xc8] sm:$0xf]
    %v159 = vld [vmem:[#allocation7 + $0xcc] sm:$0xf]
    %v160 = vld [vmem:[#allocation7 + $0xd0] sm:$0xf]
    %v161 = vld [vmem:[#allocation7 + $0xd4] sm:$0xf]
    %v162 = vld [vmem:[#allocation7 + $0xd8] sm:$0xf]
    %v163 = vld [vmem:[#allocation7 + $0xdc] sm:$0xf]
    %v164 = vld [vmem:[#allocation7 + $0xe0] sm:$0xf]
    %v165 = vld [vmem:[#allocation7 + $0xe4] sm:$0xf]
    %v166 = vld [vmem:[#allocation7 + $0xe8] sm:$0xf]
    %v167 = vld [vmem:[#allocation7 + $0xec] sm:$0xf]
    %v168 = vld [vmem:[#allocation7 + $0xf0] sm:$0xf]
    %v169 = vld [vmem:[#allocation7 + $0xf4] sm:$0xf]
    %v170 = vld [vmem:[#allocation7 + $0xf8] sm:$0xf]
    %v171 = vld [vmem:[#allocation7 + $0xfc] sm:$0xf]
    %v172 = vld [vmem:[#allocation7 + $0x100] sm:$0xf]
    %v173 = vld [vmem:[#allocation7 + $0x104] sm:$0xf]
    %v174 = vld [vmem:[#allocation7 + $0x108] sm:$0xf]
    %v175 = vld [vmem:[#allocation7 + $0x10c] sm:$0xf]
    %v176 = vld [vmem:[#allocation7 + $0x110] sm:$0xf]
    %v177 = vld [vmem:[#allocation7 + $0x114] sm:$0xf]
    %v178 = vld [vmem:[#allocation7 + $0x118] sm:$0xf]
    %v179 = vld [vmem:[#allocation7 + $0x11c] sm:$0xf]
    %v180 = vld [vmem:[#allocation7 + $0x120] sm:$0xf]
    %v181 = vld [vmem:[#allocation7 + $0x124] sm:$0xf]
    %v182 = vld [vmem:[#allocation7 + $0x128] sm:$0xf]
    %v183 = vld [vmem:[#allocation7 + $0x12c] sm:$0xf]
    %v184 = vld [vmem:[#allocation7 + $0x130] sm:$0xf]
    %v185 = vld [vmem:[#allocation7 + $0x134] sm:$0xf]
    %v186 = vld [vmem:[#allocation7 + $0x138] sm:$0xf]
    %v187 = vld [vmem:[#allocation7 + $0x13c] sm:$0xf]
    %v188 = vld [vmem:[#allocation7 + $0x140] sm:$0xf]
    %v189 = vld [vmem:[#allocation7 + $0x144] sm:$0xf]
    %v190 = vld [vmem:[#allocation7 + $0x148] sm:$0xf]
    %v191 = vld [vmem:[#allocation7 + $0x14c] sm:$0xf]
    %v192 = vld [vmem:[#allocation7 + $0x150] sm:$0xf]
    %v193 = vld [vmem:[#allocation7 + $0x154] sm:$0xf]
    %v194 = vld [vmem:[#allocation7 + $0x158] sm:$0xf]
    %v195 = vld [vmem:[#allocation7 + $0x15c] sm:$0xf]
    %v196 = vld [vmem:[#allocation7 + $0x160] sm:$0xf]
    %v197 = vld [vmem:[#allocation7 + $0x164] sm:$0xf]
    %v198 = vld [vmem:[#allocation7 + $0x168] sm:$0xf]
    %v199 = vld [vmem:[#allocation7 + $0x16c] sm:$0xf]
    %v200 = vld [vmem:[#allocation7 + $0x170] sm:$0xf]
    %v201 = vld [vmem:[#allocation7 + $0x174] sm:$0xf]
    %v202 = vld [vmem:[#allocation7 + $0x178] sm:$0xf]
    %v203 = vld [vmem:[#allocation7 + $0x17c] sm:$0xf]
    %v204 = vld [vmem:[#allocation7 + $0x180] sm:$0xf]
    %v205 = vld [vmem:[#allocation7 + $0x184] sm:$0xf]
    %v206 = vld [vmem:[#allocation7 + $0x188] sm:$0xf]
    %v207 = vld [vmem:[#allocation7 + $0x18c] sm:$0xf]
    %v208 = vld [vmem:[#allocation7 + $0x190] sm:$0xf]
    %v209 = vld [vmem:[#allocation7 + $0x194] sm:$0xf]
    %v210 = vld [vmem:[#allocation7 + $0x198] sm:$0xf]
    %v211 = vld [vmem:[#allocation7 + $0x19c] sm:$0xf]
    %v212 = vld [vmem:[#allocation7 + $0x1a0] sm:$0xf]
    %v213 = vld [vmem:[#allocation7 + $0x1a4] sm:$0xf]
    %v214 = vld [vmem:[#allocation7 + $0x1a8] sm:$0xf]
    %v215 = vld [vmem:[#allocation7 + $0x1ac] sm:$0xf]
    %v216 = vld [vmem:[#allocation7 + $0x1b0] sm:$0xf]
    %v217 = vld [vmem:[#allocation7 + $0x1b4] sm:$0xf]
    %v218 = vld [vmem:[#allocation7 + $0x1b8] sm:$0xf]
    %v219 = vld [vmem:[#allocation7 + $0x1bc] sm:$0xf]
    %v220 = vld [vmem:[#allocation7 + $0x1c0] sm:$0xf]
    %v221 = vld [vmem:[#allocation7 + $0x1c4] sm:$0xf]
    %v222 = vld [vmem:[#allocation7 + $0x1c8] sm:$0xf]
    %v223 = vld [vmem:[#allocation7 + $0x1cc] sm:$0xf]
    %v224 = vld [vmem:[#allocation7 + $0x1d0] sm:$0xf]
    %v225 = vld [vmem:[#allocation7 + $0x1d4] sm:$0xf]
    %v226 = vld [vmem:[#allocation7 + $0x1d8] sm:$0xf]
    %v227 = vld [vmem:[#allocation7 + $0x1dc] sm:$0xf]
    %v228 = vld [vmem:[#allocation7 + $0x1e0] sm:$0xf]
    %v229 = vld [vmem:[#allocation7 + $0x1e4] sm:$0xf]
    %v230 = vld [vmem:[#allocation7 + $0x1e8] sm:$0xf]
    %v231 = vld [vmem:[#allocation7 + $0x1ec] sm:$0xf]
    %v232 = vld [vmem:[#allocation7 + $0x1f0] sm:$0xf]
    %v233 = vld [vmem:[#allocation7 + $0x1f4] sm:$0xf]
    %v234 = vld [vmem:[#allocation7 + $0x1f8] sm:$0xf]
    %v235 = vld [vmem:[#allocation7 + $0x1fc] sm:$0xf]
    %v236 = vld [vmem:[#allocation7 + $0x200] sm:$0xf]
    %v237 = vld [vmem:[#allocation7 + $0x204] sm:$0xf]
    %v238 = vld [vmem:[#allocation7 + $0x208] sm:$0xf]
    %v239 = vld [vmem:[#allocation7 + $0x20c] sm:$0xf]
    %v240 = vld [vmem:[#allocation7 + $0x210] sm:$0xf]
    %v241 = vld [vmem:[#allocation7 + $0x214] sm:$0xf]
    %v242 = vld [vmem:[#allocation7 + $0x218] sm:$0xf]
    %v243 = vld [vmem:[#allocation7 + $0x21c] sm:$0xf]
    %v244 = vld [vmem:[#allocation7 + $0x220] sm:$0xf]
    %v245 = vld [vmem:[#allocation7 + $0x224] sm:$0xf]
    %v246 = vld [vmem:[#allocation7 + $0x228] sm:$0xf]
    %v247 = vld [vmem:[#allocation7 + $0x22c] sm:$0xf]
    %v248 = vld [vmem:[#allocation7 + $0x230] sm:$0xf]
    %v249 = vld [vmem:[#allocation7 + $0x234] sm:$0xf]
    %v250 = vld [vmem:[#allocation7 + $0x238] sm:$0xf]
    %v251 = vld [vmem:[#allocation7 + $0x23c] sm:$0xf]
    %v252 = vld [vmem:[#allocation7 + $0x240] sm:$0xf]
    %v253 = vld [vmem:[#allocation7 + $0x244] sm:$0xf]
    %v254 = vld [vmem:[#allocation7 + $0x248] sm:$0xf]
    %v255 = vld [vmem:[#allocation7 + $0x24c] sm:$0xf]
    %v256 = vld [vmem:[#allocation7 + $0x250] sm:$0xf]
    %v257 = vld [vmem:[#allocation7 + $0x254] sm:$0xf]
    %v258 = vld [vmem:[#allocation7 + $0x258] sm:$0xf]
    %v259 = vld [vmem:[#allocation7 + $0x25c] sm:$0xf]
    %v260 = vld [vmem:[#allocation7 + $0x260] sm:$0xf]
    %v261 = vld [vmem:[#allocation7 + $0x264] sm:$0xf]
    %v262 = vld [vmem:[#allocation7 + $0x268] sm:$0xf]
    %v263 = vld [vmem:[#allocation7 + $0x26c] sm:$0xf]
    %v264 = vld [vmem:[#allocation7 + $0x270] sm:$0xf]
    %v265 = vld [vmem:[#allocation7 + $0x274] sm:$0xf]
    %v266 = vld [vmem:[#allocation7 + $0x278] sm:$0xf]
    %v267 = vld [vmem:[#allocation7 + $0x27c] sm:$0xf]
    %v268 = vld [vmem:[#allocation7 + $0x280] sm:$0xf]
    %v269 = vld [vmem:[#allocation7 + $0x284] sm:$0xf]
    %v270 = vld [vmem:[#allocation7 + $0x288] sm:$0xf]
    %v271 = vld [vmem:[#allocation7 + $0x28c] sm:$0xf]
    %v272 = vld [vmem:[#allocation7 + $0x290] sm:$0xf]
    %v273 = vld [vmem:[#allocation7 + $0x294] sm:$0xf]
    %v274 = vld [vmem:[#allocation7 + $0x298] sm:$0xf]
    %v275 = vld [vmem:[#allocation7 + $0x29c] sm:$0xf]
    %v276 = vld [vmem:[#allocation7 + $0x2a0] sm:$0xf]
    %v277 = vld [vmem:[#allocation7 + $0x2a4] sm:$0xf]
    %v278 = vld [vmem:[#allocation7 + $0x2a8] sm:$0xf]
    %v279 = vld [vmem:[#allocation7 + $0x2ac] sm:$0xf]
    %v280 = vld [vmem:[#allocation7 + $0x2b0] sm:$0xf]
    %v281 = vld [vmem:[#allocation7 + $0x2b4] sm:$0xf]
    %v282 = vld [vmem:[#allocation7 + $0x2b8] sm:$0xf]
    %v283 = vld [vmem:[#allocation7 + $0x2bc] sm:$0xf]
    %v284 = vld [vmem:[#allocation7 + $0x2c0] sm:$0xf]
    %v285 = vld [vmem:[#allocation7 + $0x2c4] sm:$0xf]
    %v286 = vld [vmem:[#allocation7 + $0x2c8] sm:$0xf]
    %v287 = vld [vmem:[#allocation7 + $0x2cc] sm:$0xf]
    %v288 = vld [vmem:[#allocation7 + $0x2d0] sm:$0xf]
    %v289 = vld [vmem:[#allocation7 + $0x2d4] sm:$0xf]
    %v290 = vld [vmem:[#allocation7 + $0x2d8] sm:$0xf]
    %v291 = vld [vmem:[#allocation7 + $0x2dc] sm:$0xf]
    %v292 = vld [vmem:[#allocation7 + $0x2e0] sm:$0xf]
    %v293 = vld [vmem:[#allocation7 + $0x2e4] sm:$0xf]
    %v294 = vld [vmem:[#allocation7 + $0x2e8] sm:$0xf]
    %v295 = vld [vmem:[#allocation7 + $0x2ec] sm:$0xf]
    %v296 = vld [vmem:[#allocation7 + $0x2f0] sm:$0xf]
    %v297 = vld [vmem:[#allocation7 + $0x2f4] sm:$0xf]
    %v298 = vld [vmem:[#allocation7 + $0x2f8] sm:$0xf]
    %v299 = vld [vmem:[#allocation7 + $0x2fc] sm:$0xf]
    %v324 = vunpack.c.l.b16 %v84
    %v325 = vunpack.c.h.b16 %v84
    %v326 = vunpack.c.l.b16 %v85
    %v327 = vunpack.c.h.b16 %v85
    %v328 = vunpack.c.l.b16 %v86
    %v329 = vunpack.c.h.b16 %v86
    %v330 = vunpack.c.l.b16 %v87
    %v331 = vunpack.c.h.b16 %v87
    %v332 = vunpack.c.l.b16 %v88
    %v333 = vunpack.c.h.b16 %v88
    %v334 = vunpack.c.l.b16 %v89
    %v335 = vunpack.c.h.b16 %v89
    %v336 = vunpack.c.l.b16 %v90
    %v337 = vunpack.c.h.b16 %v90
    %v338 = vunpack.c.l.b16 %v91
    %v339 = vunpack.c.h.b16 %v91
    %v340 = vunpack.c.l.b16 %v92
    %v341 = vunpack.c.h.b16 %v92
    %v342 = vunpack.c.l.b16 %v93
    %v343 = vunpack.c.h.b16 %v93
    %v344 = vunpack.c.l.b16 %v94
    %v345 = vunpack.c.h.b16 %v94
    %v346 = vunpack.c.l.b16 %v95
    %v347 = vunpack.c.h.b16 %v95
    %v348 = vunpack.c.l.b16 %v96
    %v349 = vunpack.c.h.b16 %v96
    %v350 = vunpack.c.l.b16 %v97
    %v351 = vunpack.c.h.b16 %v97
    %v352 = vunpack.c.l.b16 %v98
    %v353 = vunpack.c.h.b16 %v98
    %v354 = vunpack.c.l.b16 %v99
    %v355 = vunpack.c.h.b16 %v99
    %v356 = vunpack.c.l.b16 %v100
    %v357 = vunpack.c.h.b16 %v100
    %v358 = vunpack.c.l.b16 %v101
    %v359 = vunpack.c.h.b16 %v101
    %v360 = vunpack.c.l.b16 %v102
    %v361 = vunpack.c.h.b16 %v102
    %v362 = vunpack.c.l.b16 %v103
    %v363 = vunpack.c.h.b16 %v103
    %v364 = vunpack.c.l.b16 %v104
    %v365 = vunpack.c.h.b16 %v104
    %v366 = vunpack.c.l.b16 %v105
    %v367 = vunpack.c.h.b16 %v105
    %v368 = vunpack.c.l.b16 %v106
    %v369 = vunpack.c.h.b16 %v106
    %v370 = vunpack.c.l.b16 %v107
    %v371 = vunpack.c.h.b16 %v107
    %v372 = vpack.c.b16 %v336, %v324
    %v373 = vpack.c.b16 %v337, %v325
    %v374 = vpack.c.b16 %v338, %v326
    %v375 = vpack.c.b16 %v339, %v327
    %v376 = vpack.c.b16 %v340, %v328
    %v377 = vpack.c.b16 %v341, %v329
    %v378 = vpack.c.b16 %v342, %v330
    %v379 = vpack.c.b16 %v343, %v331
    %v380 = vpack.c.b16 %v344, %v332
    %v381 = vpack.c.b16 %v345, %v333
    %v382 = vpack.c.b16 %v346, %v334
    %v383 = vpack.c.b16 %v347, %v335
    %v384 = vpack.c.b16 %v360, %v348
    %v385 = vpack.c.b16 %v361, %v349
    %v386 = vpack.c.b16 %v362, %v350
    %v387 = vpack.c.b16 %v363, %v351
    %v388 = vpack.c.b16 %v364, %v352
    %v389 = vpack.c.b16 %v365, %v353
    %v390 = vpack.c.b16 %v366, %v354
    %v391 = vpack.c.b16 %v367, %v355
    %v392 = vpack.c.b16 %v368, %v356
    %v393 = vpack.c.b16 %v369, %v357
    %v394 = vpack.c.b16 %v370, %v358
    %v395 = vpack.c.b16 %v371, %v359
    %v612 = vunpack.c.l.b16 %v108
    %v613 = vunpack.c.l.b16 %v109
    %v614 = vunpack.c.l.b16 %v110
    %v615 = vunpack.c.l.b16 %v111
    %v616 = vunpack.c.l.b16 %v112
    %v617 = vunpack.c.l.b16 %v113
    %v618 = vunpack.c.l.b16 %v114
    %v619 = vunpack.c.l.b16 %v115
    %v620 = vunpack.c.l.b16 %v116
    %v621 = vunpack.c.l.b16 %v117
    %v622 = vunpack.c.l.b16 %v118
    %v623 = vunpack.c.l.b16 %v119
    %v624 = vunpack.c.l.b16 %v120
    %v625 = vunpack.c.l.b16 %v121
    %v626 = vunpack.c.l.b16 %v122
    %v627 = vunpack.c.l.b16 %v123
    %v628 = vunpack.c.l.b16 %v124
    %v629 = vunpack.c.l.b16 %v125
    %v630 = vunpack.c.l.b16 %v126
    %v631 = vunpack.c.l.b16 %v127
    %v632 = vunpack.c.l.b16 %v128
    %v633 = vunpack.c.l.b16 %v129
    %v634 = vunpack.c.l.b16 %v130
    %v635 = vunpack.c.l.b16 %v131
    %v636 = vunpack.c.l.b16 %v132
    %v637 = vunpack.c.l.b16 %v133
    %v638 = vunpack.c.l.b16 %v134
    %v639 = vunpack.c.l.b16 %v135
    %v640 = vunpack.c.l.b16 %v136
    %v641 = vunpack.c.l.b16 %v137
    %v642 = vunpack.c.l.b16 %v138
    %v643 = vunpack.c.l.b16 %v139
    %v644 = vunpack.c.l.b16 %v140
    %v645 = vunpack.c.l.b16 %v141
    %v646 = vunpack.c.l.b16 %v142
    %v647 = vunpack.c.l.b16 %v143
    %v648 = vunpack.c.l.b16 %v144
    %v649 = vunpack.c.l.b16 %v145
    %v650 = vunpack.c.l.b16 %v146
    %v651 = vunpack.c.l.b16 %v147
    %v652 = vunpack.c.l.b16 %v148
    %v653 = vunpack.c.l.b16 %v149
    %v654 = vunpack.c.l.b16 %v150
    %v655 = vunpack.c.l.b16 %v151
    %v656 = vunpack.c.l.b16 %v152
    %v657 = vunpack.c.l.b16 %v153
    %v658 = vunpack.c.l.b16 %v154
    %v659 = vunpack.c.l.b16 %v155
    %v660 = vunpack.c.l.b16 %v156
    %v661 = vunpack.c.l.b16 %v157
    %v662 = vunpack.c.l.b16 %v158
    %v663 = vunpack.c.l.b16 %v159
    %v664 = vunpack.c.l.b16 %v160
    %v665 = vunpack.c.l.b16 %v161
    %v666 = vunpack.c.l.b16 %v162
    %v667 = vunpack.c.l.b16 %v163
    %v668 = vunpack.c.l.b16 %v164
    %v669 = vunpack.c.l.b16 %v165
    %v670 = vunpack.c.l.b16 %v166
    %v671 = vunpack.c.l.b16 %v167
    %v672 = vunpack.c.l.b16 %v168
    %v673 = vunpack.c.l.b16 %v169
    %v674 = vunpack.c.l.b16 %v170
    %v675 = vunpack.c.l.b16 %v171
    %v676 = vunpack.c.l.b16 %v172
    %v677 = vunpack.c.l.b16 %v173
    %v678 = vunpack.c.l.b16 %v174
    %v679 = vunpack.c.l.b16 %v175
    %v680 = vunpack.c.l.b16 %v176
    %v681 = vunpack.c.l.b16 %v177
    %v682 = vunpack.c.l.b16 %v178
    %v683 = vunpack.c.l.b16 %v179
    %v684 = vunpack.c.l.b16 %v180
    %v685 = vunpack.c.l.b16 %v181
    %v686 = vunpack.c.l.b16 %v182
    %v687 = vunpack.c.l.b16 %v183
    %v688 = vunpack.c.l.b16 %v184
    %v689 = vunpack.c.l.b16 %v185
    %v690 = vunpack.c.l.b16 %v186
    %v691 = vunpack.c.l.b16 %v187
    %v692 = vunpack.c.l.b16 %v188
    %v693 = vunpack.c.l.b16 %v189
    %v694 = vunpack.c.l.b16 %v190
    %v695 = vunpack.c.l.b16 %v191
    %v696 = vunpack.c.l.b16 %v192
    %v697 = vunpack.c.l.b16 %v193
    %v698 = vunpack.c.l.b16 %v194
    %v699 = vunpack.c.l.b16 %v195
    %v700 = vunpack.c.l.b16 %v196
    %v701 = vunpack.c.l.b16 %v197
    %v702 = vunpack.c.l.b16 %v198
    %v703 = vunpack.c.l.b16 %v199
    %v704 = vunpack.c.l.b16 %v200
    %v705 = vunpack.c.l.b16 %v201
    %v706 = vunpack.c.l.b16 %v202
    %v707 = vunpack.c.l.b16 %v203
    %v708 = vunpack.c.l.b16 %v204
    %v709 = vunpack.c.l.b16 %v205
    %v710 = vunpack.c.l.b16 %v206
    %v711 = vunpack.c.l.b16 %v207
    %v712 = vunpack.c.l.b16 %v208
    %v713 = vunpack.c.l.b16 %v209
    %v714 = vunpack.c.l.b16 %v210
    %v715 = vunpack.c.l.b16 %v211
    %v716 = vunpack.c.l.b16 %v212
    %v717 = vunpack.c.l.b16 %v213
    %v718 = vunpack.c.l.b16 %v214
    %v719 = vunpack.c.l.b16 %v215
    %v720 = vunpack.c.l.b16 %v216
    %v721 = vunpack.c.l.b16 %v217
    %v722 = vunpack.c.l.b16 %v218
    %v723 = vunpack.c.l.b16 %v219
    %v724 = vunpack.c.l.b16 %v220
    %v725 = vunpack.c.l.b16 %v221
    %v726 = vunpack.c.l.b16 %v222
    %v727 = vunpack.c.l.b16 %v223
    %v728 = vunpack.c.l.b16 %v224
    %v729 = vunpack.c.l.b16 %v225
    %v730 = vunpack.c.l.b16 %v226
    %v731 = vunpack.c.l.b16 %v227
    %v732 = vunpack.c.l.b16 %v228
    %v733 = vunpack.c.l.b16 %v229
    %v734 = vunpack.c.l.b16 %v230
    %v735 = vunpack.c.l.b16 %v231
    %v736 = vunpack.c.l.b16 %v232
    %v737 = vunpack.c.l.b16 %v233
    %v738 = vunpack.c.l.b16 %v234
    %v739 = vunpack.c.l.b16 %v235
    %v740 = vunpack.c.l.b16 %v236
    %v741 = vunpack.c.l.b16 %v237
    %v742 = vunpack.c.l.b16 %v238
    %v743 = vunpack.c.l.b16 %v239
    %v744 = vunpack.c.l.b16 %v240
    %v745 = vunpack.c.l.b16 %v241
    %v746 = vunpack.c.l.b16 %v242
    %v747 = vunpack.c.l.b16 %v243
    %v748 = vunpack.c.l.b16 %v244
    %v749 = vunpack.c.l.b16 %v245
    %v750 = vunpack.c.l.b16 %v246
    %v751 = vunpack.c.l.b16 %v247
    %v752 = vunpack.c.l.b16 %v248
    %v753 = vunpack.c.l.b16 %v249
    %v754 = vunpack.c.l.b16 %v250
    %v755 = vunpack.c.l.b16 %v251
    %v756 = vunpack.c.l.b16 %v252
    %v757 = vunpack.c.l.b16 %v253
    %v758 = vunpack.c.l.b16 %v254
    %v759 = vunpack.c.l.b16 %v255
    %v760 = vunpack.c.l.b16 %v256
    %v761 = vunpack.c.l.b16 %v257
    %v762 = vunpack.c.l.b16 %v258
    %v763 = vunpack.c.l.b16 %v259
    %v764 = vunpack.c.l.b16 %v260
    %v765 = vunpack.c.l.b16 %v261
    %v766 = vunpack.c.l.b16 %v262
    %v767 = vunpack.c.l.b16 %v263
    %v768 = vunpack.c.l.b16 %v264
    %v769 = vunpack.c.l.b16 %v265
    %v770 = vunpack.c.l.b16 %v266
    %v771 = vunpack.c.l.b16 %v267
    %v772 = vunpack.c.l.b16 %v268
    %v773 = vunpack.c.l.b16 %v269
    %v774 = vunpack.c.l.b16 %v270
    %v775 = vunpack.c.l.b16 %v271
    %v776 = vunpack.c.l.b16 %v272
    %v777 = vunpack.c.l.b16 %v273
    %v778 = vunpack.c.l.b16 %v274
    %v779 = vunpack.c.l.b16 %v275
    %v780 = vunpack.c.l.b16 %v276
    %v781 = vunpack.c.l.b16 %v277
    %v782 = vunpack.c.l.b16 %v278
    %v783 = vunpack.c.l.b16 %v279
    %v784 = vunpack.c.l.b16 %v280
    %v785 = vunpack.c.l.b16 %v281
    %v786 = vunpack.c.l.b16 %v282
    %v787 = vunpack.c.l.b16 %v283
    %v788 = vunpack.c.l.b16 %v284
    %v789 = vunpack.c.l.b16 %v285
    %v790 = vunpack.c.l.b16 %v286
    %v791 = vunpack.c.l.b16 %v287
    %v792 = vunpack.c.l.b16 %v288
    %v793 = vunpack.c.l.b16 %v289
    %v794 = vunpack.c.l.b16 %v290
    %v795 = vunpack.c.l.b16 %v291
    %v796 = vunpack.c.l.b16 %v292
    %v797 = vunpack.c.l.b16 %v293
    %v798 = vunpack.c.l.b16 %v294
    %v799 = vunpack.c.l.b16 %v295
    %v800 = vunpack.c.l.b16 %v296
    %v801 = vunpack.c.l.b16 %v297
    %v802 = vunpack.c.l.b16 %v298
    %v803 = vunpack.c.l.b16 %v299
    %v804 = vpack.c.b16 %v613, %v612
    %v805 = vpack.c.b16 %v615, %v614
    %v806 = vpack.c.b16 %v617, %v616
    %v807 = vpack.c.b16 %v619, %v618
    %v808 = vpack.c.b16 %v621, %v620
    %v809 = vpack.c.b16 %v623, %v622
    %v810 = vpack.c.b16 %v625, %v624
    %v811 = vpack.c.b16 %v627, %v626
    %v812 = vpack.c.b16 %v629, %v628
    %v813 = vpack.c.b16 %v631, %v630
    %v814 = vpack.c.b16 %v633, %v632
    %v815 = vpack.c.b16 %v635, %v634
    %v816 = vpack.c.b16 %v637, %v636
    %v817 = vpack.c.b16 %v639, %v638
    %v818 = vpack.c.b16 %v641, %v640
    %v819 = vpack.c.b16 %v643, %v642
    %v820 = vpack.c.b16 %v645, %v644
    %v821 = vpack.c.b16 %v647, %v646
    %v822 = vpack.c.b16 %v649, %v648
    %v823 = vpack.c.b16 %v651, %v650
    %v824 = vpack.c.b16 %v653, %v652
    %v825 = vpack.c.b16 %v655, %v654
    %v826 = vpack.c.b16 %v657, %v656
    %v827 = vpack.c.b16 %v659, %v658
    %v828 = vpack.c.b16 %v661, %v660
    %v829 = vpack.c.b16 %v663, %v662
    %v830 = vpack.c.b16 %v665, %v664
    %v831 = vpack.c.b16 %v667, %v666
    %v832 = vpack.c.b16 %v669, %v668
    %v833 = vpack.c.b16 %v671, %v670
    %v834 = vpack.c.b16 %v673, %v672
    %v835 = vpack.c.b16 %v675, %v674
    %v836 = vpack.c.b16 %v677, %v676
    %v837 = vpack.c.b16 %v679, %v678
    %v838 = vpack.c.b16 %v681, %v680
    %v839 = vpack.c.b16 %v683, %v682
    %v840 = vpack.c.b16 %v685, %v684
    %v841 = vpack.c.b16 %v687, %v686
    %v842 = vpack.c.b16 %v689, %v688
    %v843 = vpack.c.b16 %v691, %v690
    %v844 = vpack.c.b16 %v693, %v692
    %v845 = vpack.c.b16 %v695, %v694
    %v846 = vpack.c.b16 %v697, %v696
    %v847 = vpack.c.b16 %v699, %v698
    %v848 = vpack.c.b16 %v701, %v700
    %v849 = vpack.c.b16 %v703, %v702
    %v850 = vpack.c.b16 %v705, %v704
    %v851 = vpack.c.b16 %v707, %v706
    %v852 = vpack.c.b16 %v709, %v708
    %v853 = vpack.c.b16 %v711, %v710
    %v854 = vpack.c.b16 %v713, %v712
    %v855 = vpack.c.b16 %v715, %v714
    %v856 = vpack.c.b16 %v717, %v716
    %v857 = vpack.c.b16 %v719, %v718
    %v858 = vpack.c.b16 %v721, %v720
    %v859 = vpack.c.b16 %v723, %v722
    %v860 = vpack.c.b16 %v725, %v724
    %v861 = vpack.c.b16 %v727, %v726
    %v862 = vpack.c.b16 %v729, %v728
    %v863 = vpack.c.b16 %v731, %v730
    %v864 = vpack.c.b16 %v733, %v732
    %v865 = vpack.c.b16 %v735, %v734
    %v866 = vpack.c.b16 %v737, %v736
    %v867 = vpack.c.b16 %v739, %v738
    %v868 = vpack.c.b16 %v741, %v740
    %v869 = vpack.c.b16 %v743, %v742
    %v870 = vpack.c.b16 %v745, %v744
    %v871 = vpack.c.b16 %v747, %v746
    %v872 = vpack.c.b16 %v749, %v748
    %v873 = vpack.c.b16 %v751, %v750
    %v874 = vpack.c.b16 %v753, %v752
    %v875 = vpack.c.b16 %v755, %v754
    %v876 = vpack.c.b16 %v757, %v756
    %v877 = vpack.c.b16 %v759, %v758
    %v878 = vpack.c.b16 %v761, %v760
    %v879 = vpack.c.b16 %v763, %v762
    %v880 = vpack.c.b16 %v765, %v764
    %v881 = vpack.c.b16 %v767, %v766
    %v882 = vpack.c.b16 %v769, %v768
    %v883 = vpack.c.b16 %v771, %v770
    %v884 = vpack.c.b16 %v773, %v772
    %v885 = vpack.c.b16 %v775, %v774
    %v886 = vpack.c.b16 %v777, %v776
    %v887 = vpack.c.b16 %v779, %v778
    %v888 = vpack.c.b16 %v781, %v780
    %v889 = vpack.c.b16 %v783, %v782
    %v890 = vpack.c.b16 %v785, %v784
    %v891 = vpack.c.b16 %v787, %v786
    %v892 = vpack.c.b16 %v789, %v788
    %v893 = vpack.c.b16 %v791, %v790
    %v894 = vpack.c.b16 %v793, %v792
    %v895 = vpack.c.b16 %v795, %v794
    %v896 = vpack.c.b16 %v797, %v796
    %v897 = vpack.c.b16 %v799, %v798
    %v898 = vpack.c.b16 %v801, %v800
    %v899 = vpack.c.b16 %v803, %v802
    %996 = vmatprep.subr.bf16.mxu0 0
    %997 = vmatpush1.bf16.msra.mxu0 %v804
    %998 = vmatprep.subr.bf16.mxu0 0
    %999 = vmatpush1.bf16.msra.mxu0 %v805
    %1000 = vmatprep.subr.bf16.mxu0 0
    %1001 = vmatpush1.bf16.msra.mxu0 %v806
    %1002 = vmatprep.subr.bf16.mxu0 0
    %1003 = vmatpush1.bf16.msra.mxu0 %v807
    %1004 = vmatprep.subr.bf16.mxu0 0
    %1005 = vmatpush1.bf16.msra.mxu0 %v808
    %1006 = vmatprep.subr.bf16.mxu0 0
    %1007 = vmatpush1.bf16.msra.mxu0 %v809
    %1008 = vmatprep.subr.bf16.mxu0 0
    %1009 = vmatpush1.bf16.msra.mxu0 %v810
    %1010 = vmatprep.subr.bf16.mxu0 0
    %1011 = vmatpush1.bf16.msra.mxu0 %v811
    %1012 = vmatprep.subr.bf16.mxu0 0
    %1013 = vmatpush1.bf16.msra.mxu0 %v812
    %1014 = vmatprep.subr.bf16.mxu0 0
    %1015 = vmatpush1.bf16.msra.mxu0 %v813
    %1016 = vmatprep.subr.bf16.mxu0 0
    %1017 = vmatpush1.bf16.msra.mxu0 %v814
    %1018 = vmatprep.subr.bf16.mxu0 0
    %1019 = vmatpush1.bf16.msra.mxu0 %v815
    %1020 = vmatprep.subr.bf16.mxu0 0
    %1021 = vmatpush1.bf16.msra.mxu0 %v816
    %1022 = vmatprep.subr.bf16.mxu0 0
    %1023 = vmatpush1.bf16.msra.mxu0 %v817
    %1024 = vmatprep.subr.bf16.mxu0 0
    %1025 = vmatpush1.bf16.msra.mxu0 %v818
    %1026 = vmatprep.subr.bf16.mxu0 0
    %1027 = vmatpush1.bf16.msra.mxu0 %v819
    %1028 = vmatprep.mubr.bf16.mxu0 %v373
    %1029 = vmatmul.mubr.bf16.gmra.mrb[0].mxu0 %v372
    %v1030 = vpop.f32.mrb[0].mxu0
    %v1031 = vadd.f32 0.0, %v1030
    %v1032 = vpop.f32.mrb[0].mxu0
    %v1033 = vpop.f32.mrb[0].mxu0
    %v1034 = vadd.f32 0.0, %v1033
    %v1035 = vpop.f32.mrb[0].mxu0
    %1036 = vmatprep.mubr.bf16.mxu0 %v385
    %1037 = vmatmul.mubr.bf16.gmra.mrb[0].mxu0 %v384
    %v1038 = vpop.f32.mrb[0].mxu0
    %v1039 = vadd.f32 0.0, %v1038
    %v1040 = vpop.f32.mrb[0].mxu0
    %v1041 = vpop.f32.mrb[0].mxu0
    %v1042 = vadd.f32 0.0, %v1041
    %v1043 = vpop.f32.mrb[0].mxu0
    %1044 = vdwg.mxu0
    %1045 = vmatprep.subr.bf16.mxu0 0
    %1046 = vmatpush1.bf16.msra.mxu0 %v820
    %1047 = vmatprep.subr.bf16.mxu0 0
    %1048 = vmatpush1.bf16.msra.mxu0 %v821
    %1049 = vmatprep.subr.bf16.mxu0 0
    %1050 = vmatpush1.bf16.msra.mxu0 %v822
    %1051 = vmatprep.subr.bf16.mxu0 0
    %1052 = vmatpush1.bf16.msra.mxu0 %v823
    %1053 = vmatprep.subr.bf16.mxu0 0
    %1054 = vmatpush1.bf16.msra.mxu0 %v824
    %1055 = vmatprep.subr.bf16.mxu0 0
    %1056 = vmatpush1.bf16.msra.mxu0 %v825
    %1057 = vmatprep.subr.bf16.mxu0 0
    %1058 = vmatpush1.bf16.msra.mxu0 %v826
    %1059 = vmatprep.subr.bf16.mxu0 0
    %1060 = vmatpush1.bf16.msra.mxu0 %v827
    %1061 = vmatprep.subr.bf16.mxu0 0
    %1062 = vmatpush1.bf16.msra.mxu0 %v828
    %1063 = vmatprep.subr.bf16.mxu0 0
    %1064 = vmatpush1.bf16.msra.mxu0 %v829
    %1065 = vmatprep.subr.bf16.mxu0 0
    %1066 = vmatpush1.bf16.msra.mxu0 %v830
    %1067 = vmatprep.subr.bf16.mxu0 0
    %1068 = vmatpush1.bf16.msra.mxu0 %v831
    %1069 = vmatprep.subr.bf16.mxu0 0
    %1070 = vmatpush1.bf16.msra.mxu0 %v832
    %1071 = vmatprep.subr.bf16.mxu0 0
    %1072 = vmatpush1.bf16.msra.mxu0 %v833
    %1073 = vmatprep.subr.bf16.mxu0 0
    %1074 = vmatpush1.bf16.msra.mxu0 %v834
    %1075 = vmatprep.subr.bf16.mxu0 0
    %1076 = vmatpush1.bf16.msra.mxu0 %v835
    %1077 = vmatprep.mubr.bf16.mxu0 %v375
    %1078 = vmatmul.mubr.bf16.gmra.mrb[0].mxu0 %v374
    %v1079 = vpop.f32.mrb[0].mxu0
    %v1080 = vadd.f32 %v1031, %v1079
    %v1081 = vpop.f32.mrb[0].mxu0
    %v1082 = vpop.f32.mrb[0].mxu0
    %v1083 = vadd.f32 %v1034, %v1082
    %v1084 = vpop.f32.mrb[0].mxu0
    %1085 = vmatprep.mubr.bf16.mxu0 %v387
    %1086 = vmatmul.mubr.bf16.gmra.mrb[0].mxu0 %v386
    %v1087 = vpop.f32.mrb[0].mxu0
    %v1088 = vadd.f32 %v1039, %v1087
    %v1089 = vpop.f32.mrb[0].mxu0
    %v1090 = vpop.f32.mrb[0].mxu0
    %v1091 = vadd.f32 %v1042, %v1090
    %v1092 = vpop.f32.mrb[0].mxu0
    %1093 = vdwg.mxu0
    %1094 = vmatprep.subr.bf16.mxu0 0
    %1095 = vmatpush1.bf16.msra.mxu0 %v836
    %1096 = vmatprep.subr.bf16.mxu0 0
    %1097 = vmatpush1.bf16.msra.mxu0 %v837
    %1098 = vmatprep.subr.bf16.mxu0 0
    %1099 = vmatpush1.bf16.msra.mxu0 %v838
    %1100 = vmatprep.subr.bf16.mxu0 0
    %1101 = vmatpush1.bf16.msra.mxu0 %v839
    %1102 = vmatprep.subr.bf16.mxu0 0
    %1103 = vmatpush1.bf16.msra.mxu0 %v840
    %1104 = vmatprep.subr.bf16.mxu0 0
    %1105 = vmatpush1.bf16.msra.mxu0 %v841
    %1106 = vmatprep.subr.bf16.mxu0 0
    %1107 = vmatpush1.bf16.msra.mxu0 %v842
    %1108 = vmatprep.subr.bf16.mxu0 0
    %1109 = vmatpush1.bf16.msra.mxu0 %v843
    %1110 = vmatprep.subr.bf16.mxu0 0
    %1111 = vmatpush1.bf16.msra.mxu0 %v844
    %1112 = vmatprep.subr.bf16.mxu0 0
    %1113 = vmatpush1.bf16.msra.mxu0 %v845
    %1114 = vmatprep.subr.bf16.mxu0 0
    %1115 = vmatpush1.bf16.msra.mxu0 %v846
    %1116 = vmatprep.subr.bf16.mxu0 0
    %1117 = vmatpush1.bf16.msra.mxu0 %v847
    %1118 = vmatprep.subr.bf16.mxu0 0
    %1119 = vmatpush1.bf16.msra.mxu0 %v848
    %1120 = vmatprep.subr.bf16.mxu0 0
    %1121 = vmatpush1.bf16.msra.mxu0 %v849
    %1122 = vmatprep.subr.bf16.mxu0 0
    %1123 = vmatpush1.bf16.msra.mxu0 %v850
    %1124 = vmatprep.subr.bf16.mxu0 0
    %1125 = vmatpush1.bf16.msra.mxu0 %v851
    %1126 = vmatprep.mubr.bf16.mxu0 %v377
    %1127 = vmatmul.mubr.bf16.gmra.mrb[0].mxu0 %v376
    %v1128 = vpop.f32.mrb[0].mxu0
    %v1129 = vadd.f32 %v1080, %v1128
    %v1130 = vpop.f32.mrb[0].mxu0
    %v1131 = vpop.f32.mrb[0].mxu0
    %v1132 = vadd.f32 %v1083, %v1131
    %v1133 = vpop.f32.mrb[0].mxu0
    %1134 = vmatprep.mubr.bf16.mxu0 %v389
    %1135 = vmatmul.mubr.bf16.gmra.mrb[0].mxu0 %v388
    %v1136 = vpop.f32.mrb[0].mxu0
    %v1137 = vadd.f32 %v1088, %v1136
    %v1138 = vpop.f32.mrb[0].mxu0
    %v1139 = vpop.f32.mrb[0].mxu0
    %v1140 = vadd.f32 %v1091, %v1139
    %v1141 = vpop.f32.mrb[0].mxu0
    %1142 = vdwg.mxu0
    %1143 = vmatprep.subr.bf16.mxu0 0
    %1144 = vmatpush1.bf16.msra.mxu0 %v852
    %1145 = vmatprep.subr.bf16.mxu0 0
    %1146 = vmatpush1.bf16.msra.mxu0 %v853
    %1147 = vmatprep.subr.bf16.mxu0 0
    %1148 = vmatpush1.bf16.msra.mxu0 %v854
    %1149 = vmatprep.subr.bf16.mxu0 0
    %1150 = vmatpush1.bf16.msra.mxu0 %v855
    %1151 = vmatprep.subr.bf16.mxu0 0
    %1152 = vmatpush1.bf16.msra.mxu0 %v856
    %1153 = vmatprep.subr.bf16.mxu0 0
    %1154 = vmatpush1.bf16.msra.mxu0 %v857
    %1155 = vmatprep.subr.bf16.mxu0 0
    %1156 = vmatpush1.bf16.msra.mxu0 %v858
    %1157 = vmatprep.subr.bf16.mxu0 0
    %1158 = vmatpush1.bf16.msra.mxu0 %v859
    %1159 = vmatprep.subr.bf16.mxu0 0
    %1160 = vmatpush1.bf16.msra.mxu0 %v860
    %1161 = vmatprep.subr.bf16.mxu0 0
    %1162 = vmatpush1.bf16.msra.mxu0 %v861
    %1163 = vmatprep.subr.bf16.mxu0 0
    %1164 = vmatpush1.bf16.msra.mxu0 %v862
    %1165 = vmatprep.subr.bf16.mxu0 0
    %1166 = vmatpush1.bf16.msra.mxu0 %v863
    %1167 = vmatprep.subr.bf16.mxu0 0
    %1168 = vmatpush1.bf16.msra.mxu0 %v864
    %1169 = vmatprep.subr.bf16.mxu0 0
    %1170 = vmatpush1.bf16.msra.mxu0 %v865
    %1171 = vmatprep.subr.bf16.mxu0 0
    %1172 = vmatpush1.bf16.msra.mxu0 %v866
    %1173 = vmatprep.subr.bf16.mxu0 0
    %1174 = vmatpush1.bf16.msra.mxu0 %v867
    %1175 = vmatprep.mubr.bf16.mxu0 %v379
    %1176 = vmatmul.mubr.bf16.gmra.mrb[0].mxu0 %v378
    %v1177 = vpop.f32.mrb[0].mxu0
    %v1178 = vadd.f32 %v1129, %v1177
    %v1179 = vpop.f32.mrb[0].mxu0
    %v1180 = vpop.f32.mrb[0].mxu0
    %v1181 = vadd.f32 %v1132, %v1180
    %v1182 = vpop.f32.mrb[0].mxu0
    %1183 = vmatprep.mubr.bf16.mxu0 %v391
    %1184 = vmatmul.mubr.bf16.gmra.mrb[0].mxu0 %v390
    %v1185 = vpop.f32.mrb[0].mxu0
    %v1186 = vadd.f32 %v1137, %v1185
    %v1187 = vpop.f32.mrb[0].mxu0
    %v1188 = vpop.f32.mrb[0].mxu0
    %v1189 = vadd.f32 %v1140, %v1188
    %v1190 = vpop.f32.mrb[0].mxu0
    %1191 = vdwg.mxu0
    %1192 = vmatprep.subr.bf16.mxu0 0
    %1193 = vmatpush1.bf16.msra.mxu0 %v868
    %1194 = vmatprep.subr.bf16.mxu0 0
    %1195 = vmatpush1.bf16.msra.mxu0 %v869
    %1196 = vmatprep.subr.bf16.mxu0 0
    %1197 = vmatpush1.bf16.msra.mxu0 %v870
    %1198 = vmatprep.subr.bf16.mxu0 0
    %1199 = vmatpush1.bf16.msra.mxu0 %v871
    %1200 = vmatprep.subr.bf16.mxu0 0
    %1201 = vmatpush1.bf16.msra.mxu0 %v872
    %1202 = vmatprep.subr.bf16.mxu0 0
    %1203 = vmatpush1.bf16.msra.mxu0 %v873
    %1204 = vmatprep.subr.bf16.mxu0 0
    %1205 = vmatpush1.bf16.msra.mxu0 %v874
    %1206 = vmatprep.subr.bf16.mxu0 0
    %1207 = vmatpush1.bf16.msra.mxu0 %v875
    %1208 = vmatprep.subr.bf16.mxu0 0
    %1209 = vmatpush1.bf16.msra.mxu0 %v876
    %1210 = vmatprep.subr.bf16.mxu0 0
    %1211 = vmatpush1.bf16.msra.mxu0 %v877
    %1212 = vmatprep.subr.bf16.mxu0 0
    %1213 = vmatpush1.bf16.msra.mxu0 %v878
    %1214 = vmatprep.subr.bf16.mxu0 0
    %1215 = vmatpush1.bf16.msra.mxu0 %v879
    %1216 = vmatprep.subr.bf16.mxu0 0
    %1217 = vmatpush1.bf16.msra.mxu0 %v880
    %1218 = vmatprep.subr.bf16.mxu0 0
    %1219 = vmatpush1.bf16.msra.mxu0 %v881
    %1220 = vmatprep.subr.bf16.mxu0 0
    %1221 = vmatpush1.bf16.msra.mxu0 %v882
    %1222 = vmatprep.subr.bf16.mxu0 0
    %1223 = vmatpush1.bf16.msra.mxu0 %v883
    %1224 = vmatprep.mubr.bf16.mxu0 %v381
    %1225 = vmatmul.mubr.bf16.gmra.mrb[0].mxu0 %v380
    %v1226 = vpop.f32.mrb[0].mxu0
    %v1227 = vadd.f32 %v1178, %v1226
    %v1228 = vpop.f32.mrb[0].mxu0
    %v1229 = vpop.f32.mrb[0].mxu0
    %v1230 = vadd.f32 %v1181, %v1229
    %v1231 = vpop.f32.mrb[0].mxu0
    %1232 = vmatprep.mubr.bf16.mxu0 %v393
    %1233 = vmatmul.mubr.bf16.gmra.mrb[0].mxu0 %v392
    %v1234 = vpop.f32.mrb[0].mxu0
    %v1235 = vadd.f32 %v1186, %v1234
    %v1236 = vpop.f32.mrb[0].mxu0
    %v1237 = vpop.f32.mrb[0].mxu0
    %v1238 = vadd.f32 %v1189, %v1237
    %v1239 = vpop.f32.mrb[0].mxu0
    %1240 = vdwg.mxu0
    %1241 = vmatprep.subr.bf16.mxu0 0
    %1242 = vmatpush1.bf16.msra.mxu0 %v884
    %1243 = vmatprep.subr.bf16.mxu0 0
    %1244 = vmatpush1.bf16.msra.mxu0 %v885
    %1245 = vmatprep.subr.bf16.mxu0 0
    %1246 = vmatpush1.bf16.msra.mxu0 %v886
    %1247 = vmatprep.subr.bf16.mxu0 0
    %1248 = vmatpush1.bf16.msra.mxu0 %v887
    %1249 = vmatprep.subr.bf16.mxu0 0
    %1250 = vmatpush1.bf16.msra.mxu0 %v888
    %1251 = vmatprep.subr.bf16.mxu0 0
    %1252 = vmatpush1.bf16.msra.mxu0 %v889
    %1253 = vmatprep.subr.bf16.mxu0 0
    %1254 = vmatpush1.bf16.msra.mxu0 %v890
    %1255 = vmatprep.subr.bf16.mxu0 0
    %1256 = vmatpush1.bf16.msra.mxu0 %v891
    %1257 = vmatprep.subr.bf16.mxu0 0
    %1258 = vmatpush1.bf16.msra.mxu0 %v892
    %1259 = vmatprep.subr.bf16.mxu0 0
    %1260 = vmatpush1.bf16.msra.mxu0 %v893
    %1261 = vmatprep.subr.bf16.mxu0 0
    %1262 = vmatpush1.bf16.msra.mxu0 %v894
    %1263 = vmatprep.subr.bf16.mxu0 0
    %1264 = vmatpush1.bf16.msra.mxu0 %v895
    %1265 = vmatprep.subr.bf16.mxu0 0
    %1266 = vmatpush1.bf16.msra.mxu0 %v896
    %1267 = vmatprep.subr.bf16.mxu0 0
    %1268 = vmatpush1.bf16.msra.mxu0 %v897
    %1269 = vmatprep.subr.bf16.mxu0 0
    %1270 = vmatpush1.bf16.msra.mxu0 %v898
    %1271 = vmatprep.subr.bf16.mxu0 0
    %1272 = vmatpush1.bf16.msra.mxu0 %v899
    %1273 = vmatprep.mubr.bf16.mxu0 %v383
    %1274 = vmatmul.mubr.bf16.gmra.mrb[0].mxu0 %v382
    %v1275 = vpop.f32.mrb[0].mxu0
    %v1276 = vadd.f32 %v1227, %v1275
    %v1277 = vpop.f32.mrb[0].mxu0
    %v1278 = vpop.f32.mrb[0].mxu0
    %v1279 = vadd.f32 %v1230, %v1278
    %v1280 = vpop.f32.mrb[0].mxu0
    %1281 = vmatprep.mubr.bf16.mxu0 %v395
    %1282 = vmatmul.mubr.bf16.gmra.mrb[0].mxu0 %v394
    %v1283 = vpop.f32.mrb[0].mxu0
    %v1284 = vadd.f32 %v1235, %v1283
    %v1285 = vpop.f32.mrb[0].mxu0
    %v1286 = vpop.f32.mrb[0].mxu0
    %v1287 = vadd.f32 %v1238, %v1286
    %v1288 = vpop.f32.mrb[0].mxu0
    %1289 = vdwg.mxu0
    %v1290 = vpack.c.bf16 %v1279, %v1276
    %v1291 = vpack.c.bf16 %v1287, %v1284
    %v1292 = vld [vmem:[%s3] sm:$0x1]
    %v1294 = vlaneseq
    %v1295 = vshrl.u32 %v1294, 7
    %v1296 = vsub.s32 0, %v1295
    %v1297 = vrot.slane %v1292, %v1296
    %v1303 = vunpack.c.l.b16 %v80
    %v1304 = vunpack.c.l.b16 %v81
    %v1305 = vunpack.c.l.b16 %v82
    %v1306 = vunpack.c.l.b16 %v83
    %v1307 = vpack.c.b16 %v1304, %v1303
    %v1308 = vpack.c.b16 %v1306, %v1305
    %vm1309 = vcmask 261120
    %v1311 = vsel %vm1309, %v1307, 0
    %v1314 = vsel %vm1309, %v1308, 0
    %1316 = vmatprep.subr.bf16.mxu0 0
    %1317 = vmatpush1.bf16.msra.mxu0 %v1290
    %1318 = vmatprep.subr.bf16.mxu0 0
    %1319 = vmatpush1.bf16.msra.mxu0 %v1291
    %1320 = vmatprep.subr.bf16.mxu0 0
    %1321 = vmatpush1.bf16.msra.mxu0 0
    %1322 = vmatprep.subr.bf16.mxu0 0
    %1323 = vmatpush1.bf16.msra.mxu0 0
    %1324 = vmatprep.subr.bf16.mxu0 0
    %1325 = vmatpush1.bf16.msra.mxu0 0
    %1326 = vmatprep.subr.bf16.mxu0 0
    %1327 = vmatpush1.bf16.msra.mxu0 0
    %1328 = vmatprep.subr.bf16.mxu0 0
    %1329 = vmatpush1.bf16.msra.mxu0 0
    %1330 = vmatprep.subr.bf16.mxu0 0
    %1331 = vmatpush1.bf16.msra.mxu0 0
    %1332 = vmatprep.subr.bf16.mxu0 0
    %1333 = vmatpush1.bf16.msra.mxu0 0
    %1334 = vmatprep.subr.bf16.mxu0 0
    %1335 = vmatpush1.bf16.msra.mxu0 0
    %1336 = vmatprep.subr.bf16.mxu0 0
    %1337 = vmatpush1.bf16.msra.mxu0 0
    %1338 = vmatprep.subr.bf16.mxu0 0
    %1339 = vmatpush1.bf16.msra.mxu0 0
    %1340 = vmatprep.subr.bf16.mxu0 0
    %1341 = vmatpush1.bf16.msra.mxu0 0
    %1342 = vmatprep.subr.bf16.mxu0 0
    %1343 = vmatpush1.bf16.msra.mxu0 0
    %1344 = vmatprep.subr.bf16.mxu0 0
    %1345 = vmatpush1.bf16.msra.mxu0 0
    %1346 = vmatprep.subr.bf16.mxu0 0
    %1347 = vmatpush1.bf16.msra.mxu0 0
    %1348 = vmatprep.mubr.bf16.mxu0 0
    %1349 = vmatmul.mubr.bf16.gmra.mrb[0].mxu0 %v1311
    %v1350 = vpop.f32.mrb[0].mxu0
    %v1351 = vadd.f32 %v1297, %v1350
    %v1352 = vpop.f32.mrb[0].mxu0
    %v1353 = vpop.f32.mrb[0].mxu0
    %v1354 = vadd.f32 %v1297, %v1353
    %v1355 = vpop.f32.mrb[0].mxu0
    %1356 = vmatprep.mubr.bf16.mxu0 0
    %1357 = vmatmul.mubr.bf16.gmra.mrb[0].mxu0 %v1314
    %v1358 = vpop.f32.mrb[0].mxu0
    %v1359 = vadd.f32 %v1297, %v1358
    %v1360 = vpop.f32.mrb[0].mxu0
    %v1361 = vpop.f32.mrb[0].mxu0
    %v1362 = vadd.f32 %v1297, %v1361
    %v1363 = vpop.f32.mrb[0].mxu0
    %1364 = vdwg.mxu0
    %v1365 = vmax.f32 %v1351, 0.0
    %v1366 = vmax.f32 %v1354, 0.0
    %v1367 = vmax.f32 %v1359, 0.0
    %v1368 = vmax.f32 %v1362, 0.0
    %v1369 = vpack.c.bf16 %v1366, %v1365
    %v1370 = vpack.c.bf16 %v1368, %v1367
    %v1371 = vld [vmem:[#allocation8] sm:$0xf]
    %v1372 = vld [vmem:[#allocation8 + $0x4] sm:$0xf]
    %v1373 = vld [vmem:[#allocation8 + $0x8] sm:$0xf]
    %v1374 = vld [vmem:[#allocation8 + $0xc] sm:$0xf]
    %v1375 = vld [vmem:[#allocation8 + $0x10] sm:$0xf]
    %v1376 = vld [vmem:[#allocation8 + $0x14] sm:$0xf]
    %v1377 = vld [vmem:[#allocation8 + $0x18] sm:$0xf]
    %v1378 = vld [vmem:[#allocation8 + $0x1c] sm:$0xf]
    %v1379 = vld [vmem:[#allocation8 + $0x20] sm:$0xf]
    %v1380 = vld [vmem:[#allocation8 + $0x24] sm:$0xf]
    %v1381 = vld [vmem:[#allocation8 + $0x28] sm:$0xf]
    %v1382 = vld [vmem:[#allocation8 + $0x2c] sm:$0xf]
    %v1383 = vld [vmem:[#allocation8 + $0x30] sm:$0xf]
    %v1384 = vld [vmem:[#allocation8 + $0x34] sm:$0xf]
    %v1385 = vld [vmem:[#allocation8 + $0x38] sm:$0xf]
    %v1386 = vld [vmem:[#allocation8 + $0x3c] sm:$0xf]
    %v1403 = vunpack.c.l.b16 %v1371
    %v1404 = vunpack.c.l.b16 %v1372
    %v1405 = vunpack.c.l.b16 %v1373
    %v1406 = vunpack.c.l.b16 %v1374
    %v1407 = vunpack.c.l.b16 %v1375
    %v1408 = vunpack.c.l.b16 %v1376
    %v1409 = vunpack.c.l.b16 %v1377
    %v1410 = vunpack.c.l.b16 %v1378
    %v1411 = vunpack.c.l.b16 %v1379
    %v1412 = vunpack.c.l.b16 %v1380
    %v1413 = vunpack.c.l.b16 %v1381
    %v1414 = vunpack.c.l.b16 %v1382
    %v1415 = vunpack.c.l.b16 %v1383
    %v1416 = vunpack.c.l.b16 %v1384
    %v1417 = vunpack.c.l.b16 %v1385
    %v1418 = vunpack.c.l.b16 %v1386
    %v1419 = vpack.c.b16 %v1404, %v1403
    %v1420 = vpack.c.b16 %v1406, %v1405
    %v1421 = vpack.c.b16 %v1408, %v1407
    %v1422 = vpack.c.b16 %v1410, %v1409
    %v1423 = vpack.c.b16 %v1412, %v1411
    %v1424 = vpack.c.b16 %v1414, %v1413
    %v1425 = vpack.c.b16 %v1416, %v1415
    %v1426 = vpack.c.b16 %v1418, %v1417
    %1435 = vmatprep.subr.bf16.mxu0 0
    %1436 = vmatpush1.bf16.msra.mxu0 %v1419
    %1437 = vmatprep.subr.bf16.mxu0 0
    %1438 = vmatpush1.bf16.msra.mxu0 %v1420
    %1439 = vmatprep.subr.bf16.mxu0 0
    %1440 = vmatpush1.bf16.msra.mxu0 %v1421
    %1441 = vmatprep.subr.bf16.mxu0 0
    %1442 = vmatpush1.bf16.msra.mxu0 %v1422
    %1443 = vmatprep.subr.bf16.mxu0 0
    %1444 = vmatpush1.bf16.msra.mxu0 %v1423
    %1445 = vmatprep.subr.bf16.mxu0 0
    %1446 = vmatpush1.bf16.msra.mxu0 %v1424
    %1447 = vmatprep.subr.bf16.mxu0 0
    %1448 = vmatpush1.bf16.msra.mxu0 %v1425
    %1449 = vmatprep.subr.bf16.mxu0 0
    %1450 = vmatpush1.bf16.msra.mxu0 %v1426
    %1451 = vmatprep.subr.bf16.mxu0 0
    %1452 = vmatpush1.bf16.msra.mxu0 0
    %1453 = vmatprep.subr.bf16.mxu0 0
    %1454 = vmatpush1.bf16.msra.mxu0 0
    %1455 = vmatprep.subr.bf16.mxu0 0
    %1456 = vmatpush1.bf16.msra.mxu0 0
    %1457 = vmatprep.subr.bf16.mxu0 0
    %1458 = vmatpush1.bf16.msra.mxu0 0
    %1459 = vmatprep.subr.bf16.mxu0 0
    %1460 = vmatpush1.bf16.msra.mxu0 0
    %1461 = vmatprep.subr.bf16.mxu0 0
    %1462 = vmatpush1.bf16.msra.mxu0 0
    %1463 = vmatprep.subr.bf16.mxu0 0
    %1464 = vmatpush1.bf16.msra.mxu0 0
    %1465 = vmatprep.subr.bf16.mxu0 0
    %1466 = vmatpush1.bf16.msra.mxu0 0
    %1467 = vmatprep.mubr.bf16.mxu0 0
    %1468 = vmatmul.mubr.bf16.gmra.mrb[0].mxu0 %v1369
    %v1469 = vpop.f32.mrb[0].mxu0
    %v1470 = vadd.f32 0.0, %v1469
    %v1471 = vpop.f32.mrb[0].mxu0
    %v1472 = vpop.f32.mrb[0].mxu0
    %v1473 = vadd.f32 0.0, %v1472
    %v1474 = vpop.f32.mrb[0].mxu0
    %1475 = vmatprep.mubr.bf16.mxu0 0
    %1476 = vmatmul.mubr.bf16.gmra.mrb[0].mxu0 %v1370
    %v1477 = vpop.f32.mrb[0].mxu0
    %v1478 = vadd.f32 0.0, %v1477
    %v1479 = vpop.f32.mrb[0].mxu0
    %v1480 = vpop.f32.mrb[0].mxu0
    %v1481 = vadd.f32 0.0, %v1480
    %v1482 = vpop.f32.mrb[0].mxu0
    %1483 = vdwg.mxu0
    %v1484 = vpack.c.bf16 %v1473, %v1470
    %v1485 = vpack.c.bf16 %v1481, %v1478
    %v1486 = vld [vmem:[%s5] sm:$0x1]
    %v1488 = vlaneseq
    %v1489 = vshrl.u32 %v1488, 7
    %v1490 = vsub.s32 0, %v1489
    %v1491 = vrot.slane %v1486, %v1490
    %1493 = vmatprep.subr.bf16.mxu0 0
    %1494 = vmatpush1.bf16.msra.mxu0 %v1484
    %1495 = vmatprep.subr.bf16.mxu0 0
    %1496 = vmatpush1.bf16.msra.mxu0 %v1485
    %1497 = vmatprep.subr.bf16.mxu0 0
    %1498 = vmatpush1.bf16.msra.mxu0 0
    %1499 = vmatprep.subr.bf16.mxu0 0
    %1500 = vmatpush1.bf16.msra.mxu0 0
    %1501 = vmatprep.subr.bf16.mxu0 0
    %1502 = vmatpush1.bf16.msra.mxu0 0
    %1503 = vmatprep.subr.bf16.mxu0 0
    %1504 = vmatpush1.bf16.msra.mxu0 0
    %1505 = vmatprep.subr.bf16.mxu0 0
    %1506 = vmatpush1.bf16.msra.mxu0 0
    %1507 = vmatprep.subr.bf16.mxu0 0
    %1508 = vmatpush1.bf16.msra.mxu0 0
    %1509 = vmatprep.subr.bf16.mxu0 0
    %1510 = vmatpush1.bf16.msra.mxu0 0
    %1511 = vmatprep.subr.bf16.mxu0 0
    %1512 = vmatpush1.bf16.msra.mxu0 0
    %1513 = vmatprep.subr.bf16.mxu0 0
    %1514 = vmatpush1.bf16.msra.mxu0 0
    %1515 = vmatprep.subr.bf16.mxu0 0
    %1516 = vmatpush1.bf16.msra.mxu0 0
    %1517 = vmatprep.subr.bf16.mxu0 0
    %1518 = vmatpush1.bf16.msra.mxu0 0
    %1519 = vmatprep.subr.bf16.mxu0 0
    %1520 = vmatpush1.bf16.msra.mxu0 0
    %1521 = vmatprep.subr.bf16.mxu0 0
    %1522 = vmatpush1.bf16.msra.mxu0 0
    %1523 = vmatprep.subr.bf16.mxu0 0
    %1524 = vmatpush1.bf16.msra.mxu0 0
    %1525 = vmatprep.mubr.bf16.mxu0 0
    %1526 = vmatmul.mubr.bf16.gmra.mrb[0].mxu0 %v1311
    %v1527 = vpop.f32.mrb[0].mxu0
    %v1528 = vadd.f32 %v1491, %v1527
    %v1529 = vpop.f32.mrb[0].mxu0
    %v1530 = vpop.f32.mrb[0].mxu0
    %v1531 = vadd.f32 %v1491, %v1530
    %v1532 = vpop.f32.mrb[0].mxu0
    %1533 = vmatprep.mubr.bf16.mxu0 0
    %1534 = vmatmul.mubr.bf16.gmra.mrb[0].mxu0 %v1314
    %v1535 = vpop.f32.mrb[0].mxu0
    %v1536 = vadd.f32 %v1491, %v1535
    %v1537 = vpop.f32.mrb[0].mxu0
    %v1538 = vpop.f32.mrb[0].mxu0
    %v1539 = vadd.f32 %v1491, %v1538
    %v1540 = vpop.f32.mrb[0].mxu0
    %1541 = vdwg.mxu0
    %v1542 = vmax.f32 %v1528, 0.0
    %v1543 = vmax.f32 %v1531, 0.0
    %v1544 = vmax.f32 %v1536, 0.0
    %v1545 = vmax.f32 %v1539, 0.0
    %1546 = vst [vmem:[#allocation10] sm:$0xff] %v1542
    %1547 = vst [vmem:[#allocation10 + $0x8] sm:$0xff] %v1543
    %1548 = vst [vmem:[#allocation10 + $0x10] sm:$0xff] %v1544
    %1549 = vst [vmem:[#allocation10 + $0x18] sm:$0xff] %v1545
    // Predicated region
    $region42: #{tpu_custom_call.1} parent=1 // pred_check
      _
    $region43: #{tpu_custom_call.1} parent=1 // pred_check_branch
      %1551 = sbr.rel (0) target = $region45
    $region44: #{tpu_custom_call.1} parent=1 // pred_region
      %s1553 = ssub.s32 512, 512
      %1554 = vsyncadd [#allocation4], %s1553
      %s1555 = sshll.u32 [#allocation10], 4
      %s1556 = int_to_ptr.vmem [resolvable:$true] %s1555
      %1561 = dma.vmem_to_hbm [thread:$0]  %s1556, 512, %s6, [#allocation4], 128, 128, 8
    $region45: #{tpu_custom_call.1} parent=1 // pred_fallthru
      _
    // Predicated region
    $region46: #{tpu_custom_call.1} parent=1 // pred_check
      _
    $region47: #{tpu_custom_call.1} parent=1 // pred_check_branch
      %1563 = sbr.rel (0) target = $region49
    $region48: #{tpu_custom_call.1} parent=1 // pred_region
      %1564 = dma.done [#allocation4], 512
    $region49: #{tpu_custom_call.1} parent=1 // pred_fallthru
      _
    %1565 = vsyncpa [#allocation3], 1
    %1566 = vsyncpa [#allocation6], 1
    %1567 = vsyncpa [#allocation9], 1
    %1568 = vsyncpa [#allocation4], 1

</llo_original>
